<compile_context>
chip_gen: v7x
topology: tpu7x:2x2x1
jax: 0.10.0
libtpu: 0.0.40
codegen_flags: <defaults>
</compile_context>

<pallas_src>
import functools

import jax
import jax.numpy as jnp
from jax.experimental import pallas as pl
from jax.experimental.pallas import tpu as pltpu

T_STUDENT = 0.07     # self.t    (student temperature)
T_TEACHER = 0.0001   # self.temp (distillation temperature)
_LANES = 128


def _vmem_capacity_bytes(default=64 << 20):
    """Physical VMEM per core; falls back to the v7x-conservative 64 MiB."""
    try:
        cap = int(pltpu.get_tpu_info().vmem_capacity_bytes)
        if cap > 0:
            return cap
    except Exception:
        pass
    return default


def _lane_partial_sum(x, lanes=_LANES):
    """(rows, tk) -> (rows, lanes) partial sums via vreg-aligned VPU adds only.

    Avoids per-tile XLU cross-lane tree reductions; the final reduce over the
    128 lanes is done once, in the JAX wrapper.
    """
    tk = x.shape[1]
    acc = x[:, 0:lanes]
    for i in range(1, tk // lanes):
        acc = acc + x[:, i * lanes:(i + 1) * lanes]
    return acc


def _seed_kernel(ts_ref, q_ref, etea_ref, scross_ref, estu_ref, *, n_pad):
    """One grid step = one (C, TK) queue tile for one K-split.

    ts_ref     : (2*N_pad, C)  stacked, pre-normalized [teacher; student]
    q_ref      : (C, TK)       current queue tile (columns unit-norm)
    etea_ref   : (N_pad, 128)  lane-partial  sum_j exp((z_tea_j - 1)/temp)
    scross_ref : (N_pad, 128)  lane-partial  sum_j exp((z_tea_j - 1)/temp) * z_stu_j / t
    estu_ref   : (N_pad, 128)  lane-partial  sum_j exp((z_stu_j - 1)/t)
    """
    j = pl.program_id(1)
    inv_t = 1.0 / T_STUDENT
    inv_temp = 1.0 / T_TEACHER

    @pl.when(j == 0)
    def _init():
        etea_ref[...] = jnp.zeros_like(etea_ref)
        scross_ref[...] = jnp.zeros_like(scross_ref)
        estu_ref[...] = jnp.zeros_like(estu_ref)

    # Single stacked matmul: the (C, TK) weights hit the MXU once for both
    # teacher and student rows.
    ts = ts_ref[...].astype(jnp.float32)                       # (2*N_pad, C)
    q = q_ref[...].astype(jnp.float32)                         # (C, TK)
    z = jnp.dot(ts, q, preferred_element_type=jnp.float32)     # (2*N_pad, TK)
    z_tea = z[0:n_pad, :]
    z_stu = z[n_pad:2 * n_pad, :]

    # Fixed shift of 1.0 is the exact max (cosines <= 1, positive logit == 1).
    w = jnp.exp((z_tea - 1.0) * inv_temp)                      # teacher weights
    e_s = jnp.exp((z_stu - 1.0) * inv_t)

    etea_ref[...] += _lane_partial_sum(w)
    scross_ref[...] += _lane_partial_sum(w * (z_stu * inv_t))
    estu_ref[...] += _lane_partial_sum(e_s)


def _pick_tile(k, c, n_pad, *, budget_bytes, max_tk, q_itemsize=4):
    """Largest queue tile (multiple of 128 dividing K, <= max_tk) in budget."""
    assert k % 128 == 0, "queue length K must be a multiple of 128"
    best = 128
    for t in range(128, min(k, max_tk) + 1, 128):
        if k % t:
            continue
        need = (2 * c * t * q_itemsize            # double-buffered queue tile
                + 2 * (2 * n_pad) * c * 4         # double-buffered feature block
                + 3 * 2 * n_pad * _LANES * 4      # 3 lane-partial outputs x 2 bufs
                + 4 * (2 * n_pad) * t * 4)        # logits / exp temporaries (spill)
        if need <= budget_bytes:
            best = t
    return best


def seed_loss(teacher_feature, student_feature, queue, *, tk=None,
              assume_normalized_queue=True):
    """SEED.forward: returns the scalar distillation loss.

    teacher_feature, student_feature : (N, C) float
    queue                            : (C, K) float, columns L2-normalized
    """
    n, c = teacher_feature.shape
    c2, k = queue.shape
    assert c == c2
    assert k % 128 == 0

    inv_t = 1.0 / T_STUDENT

    t_f = teacher_feature.astype(jnp.float32)
    s_f = student_feature.astype(jnp.float32)
    t_norm = t_f * jax.lax.rsqrt(jnp.sum(t_f * t_f, axis=1, keepdims=True))
    s_norm = s_f * jax.lax.rsqrt(jnp.sum(s_f * s_f, axis=1, keepdims=True))
    if not assume_normalized_queue:
        qn = jnp.linalg.norm(queue.astype(jnp.float32), axis=0, keepdims=True)
        queue = queue / qn

    # Pad the batch to a multiple of 8 sublanes and stack [teacher; student]
    # so the in-kernel z[:N_pad] / z[N_pad:] slices never cut a sublane group.
    n_pad = ((n + 7) // 8) * 8
    ts = jnp.zeros((2 * n_pad, c), jnp.float32)
    ts = ts.at[0:n, :].set(t_norm)
    ts = ts.at[n_pad:n_pad + n, :].set(s_norm)

    sp = jnp.sum(s_norm * t_norm, axis=1)          # (N,) positive student logits

    # Hardware-aware VMEM sizing: budget = phys/4, scoped limit = phys/2.
    phys = _vmem_capacity_bytes()
    budget = phys // 4
    limit = phys // 2
    q_itemsize = jnp.dtype(queue.dtype).itemsize
    if tk is None:
        # Keep >= 4 grid steps whenever the queue exceeds ~2 MiB so the queue
        # DMA overlaps with compute; whole-K tiles only for toy sizes.
        small_queue = c * k * q_itemsize <= (2 << 20)
        max_tk = k if small_queue else max(128, k // 4)
        tk = _pick_tile(k, c, n_pad, budget_bytes=budget, max_tk=max_tk,
                        q_itemsize=q_itemsize)
        if tk < 512 and phys >= (128 << 20):
            # v5e/v6e have 2x v7x's VMEM: spend it on a bigger lane-dense tile.
            budget = (phys * 3) // 8
            limit = min((phys * 3) // 4, 96 << 20)
            tk = _pick_tile(k, c, n_pad, budget_bytes=budget, max_tk=max_tk,
                            q_itemsize=q_itemsize)
    assert k % tk == 0 and tk % 128 == 0

    total_steps = k // tk
    # Split the K reduction across a leading "parallel" axis: 2 TensorCores on
    # v7x get half the queue each; on 1-TC chips the split runs sequentially
    # at negligible cost (two tiny output-block writebacks).
    n_splits = 2 if (total_steps >= 2 and total_steps % 2 == 0) else 1
    steps = total_steps // n_splits

    kernel = functools.partial(_seed_kernel, n_pad=n_pad)
    cost = pl.CostEstimate(
        flops=2 * (2 * n_pad) * c * k + 8 * n_pad * k,
        transcendentals=2 * n_pad * k,
        bytes_accessed=(c * k * q_itemsize + 2 * n_pad * c * 4
                        + 3 * n_splits * n_pad * _LANES * 4),
    )
    part_shape = jax.ShapeDtypeStruct((n_splits, n_pad, _LANES), jnp.float32)
    # NOTE: the feature block has a constant index map, so Pallas only DMAs it
    # once; no extra buffering knobs needed (it is ~KB-sized anyway).
    etea_p, scross_p, estu_p = pl.pallas_call(
        kernel,
        out_shape=(part_shape, part_shape, part_shape),
        grid_spec=pltpu.PrefetchScalarGridSpec(
            num_scalar_prefetch=0,
            grid=(n_splits, steps),
            in_specs=[
                pl.BlockSpec((2 * n_pad, c), lambda s, j: (0, 0)),
                pl.BlockSpec((c, tk), lambda s, j: (0, s * steps + j)),
            ],
            out_specs=[
                pl.BlockSpec((None, n_pad, _LANES), lambda s, j: (s, 0, 0)),
                pl.BlockSpec((None, n_pad, _LANES), lambda s, j: (s, 0, 0)),
                pl.BlockSpec((None, n_pad, _LANES), lambda s, j: (s, 0, 0)),
            ],
        ),
        compiler_params=pltpu.CompilerParams(
            dimension_semantics=("parallel", "arbitrary"),
            vmem_limit_bytes=int(limit),
        ),
        cost_estimate=cost,
    )(ts, queue)

    # O(N) finalize in the wrapper: combine per-split lane-partial sums, add
    # the prepended "positive" column (teacher weight exp((1-1)/temp) == 1),
    # then apply the fixed shift-of-1 log-sum-exp closure.
    e_tea = 1.0 + jnp.sum(etea_p, axis=(0, 2))[:n]
    s_cross = sp * inv_t + jnp.sum(scross_p, axis=(0, 2))[:n]
    e_stu = jnp.exp((sp - 1.0) * inv_t) + jnp.sum(estu_p, axis=(0, 2))[:n]
    lse_stu = inv_t + jnp.log(e_stu)
    per_row = s_cross / e_tea - lse_stu            # E_tea[log_softmax_stu] per row
    return -jnp.sum(per_row) / n


def dequeue_and_enqueue(queue, queue_ptr, teacher_feature):
    """SEED._dequeue_and_enqueue (dist=False path): plain-JAX buffer update glue."""
    t_emb = teacher_feature / jnp.linalg.norm(teacher_feature, axis=1, keepdims=True)
    batch = t_emb.shape[0]
    k = queue.shape[1]
    new_queue = jax.lax.dynamic_update_slice(queue, t_emb.T, (0, queue_ptr))
    new_ptr = (queue_ptr + batch) % k
    return new_queue, new_ptr
    # TODO(synk): concat_all_gather (torch.distributed.all_gather) path is a
    # multi-host collective and is not modeled here (args.distributed=False).


def seed_loss_reference(teacher_feature, student_feature, queue,
                        t=T_STUDENT, temp=T_TEACHER):
    """Pure-JAX reference mirroring the PyTorch forward exactly."""
    t_emb = teacher_feature / jnp.linalg.norm(teacher_feature, axis=1, keepdims=True)
    s_emb = student_feature / jnp.linalg.norm(student_feature, axis=1, keepdims=True)
    logit_stu = s_emb @ queue
    logit_tea = t_emb @ queue
    sp = jnp.sum(s_emb * t_emb, axis=1, keepdims=True)
    tp = jnp.sum(t_emb * t_emb, axis=1, keepdims=True)
    logit_stu = jnp.concatenate([sp, logit_stu], axis=1) / t
    logit_tea = jax.nn.softmax(jnp.concatenate([tp, logit_tea], axis=1) / temp, axis=1)
    return -(logit_tea * jax.nn.log_softmax(logit_stu, axis=1)).sum() / teacher_feature.shape[0]


if __name__ == "__main__":
    # Small, module-consistent synthetic shapes: N=8 samples, dim=32, K=2048 queue.
    N, DIM, K = 8, 32, 2048

    key = jax.random.PRNGKey(0)
    k_q, k_t, k_s = jax.random.split(key, 3)

    # register_buffer('queue', randn(dim, K)); normalize(queue, dim=0)
    queue = jax.random.normal(k_q, (DIM, K), dtype=jnp.float32)
    queue = queue / jnp.linalg.norm(queue, axis=0, keepdims=True)
    queue_ptr = jnp.int32(0)

    teacher_feature = jax.random.normal(k_t, (N, DIM), dtype=jnp.float32)
    student_feature = jax.random.normal(k_s, (N, DIM), dtype=jnp.float32)

    ref = seed_loss_reference(teacher_feature, student_feature, queue)

    # 1) Default auto-tiled path (toy queue -> single whole-K tile).
    loss = jax.block_until_ready(seed_loss(teacher_feature, student_feature, queue))
    assert jnp.isfinite(loss), "loss is not finite"
    assert jnp.allclose(loss, ref, rtol=1e-4, atol=1e-4), (loss, ref)

    # 2) Multi-step path: explicit tk exercises the pipelined queue stream and
    #    the 2-way "parallel" K split (grid (2, 4)).
    loss2 = jax.block_until_ready(
        seed_loss(teacher_feature, student_feature, queue, tk=256))
    assert jnp.allclose(loss2, ref, rtol=1e-4, atol=1e-4), (loss2, ref)

    # 3) Non-multiple-of-8 batch exercises the sublane padding path.
    N2 = 6
    ref3 = seed_loss_reference(teacher_feature[:N2], student_feature[:N2], queue)
    loss3 = jax.block_until_ready(
        seed_loss(teacher_feature[:N2], student_feature[:N2], queue))
    assert jnp.allclose(loss3, ref3, rtol=1e-4, atol=1e-4), (loss3, ref3)

    # Buffer side-effect of forward (queue enqueue), kept as plain-JAX glue.
    new_queue, new_ptr = dequeue_and_enqueue(queue, queue_ptr, teacher_feature)
    jax.block_until_ready(new_queue)

    print("KERNEL_OK")
</pallas_src>

<mosaic_0001>
module attributes {stable_mosaic.version = 11 : i64} {
  func.func @_seed_kernel(%arg0: i32, %arg1: i32, %arg2: memref<16x32xf32, #tpu.memory_space<vmem>>, %arg3: memref<32x2048xf32, #tpu.memory_space<vmem>>, %arg4: memref<1x8x128xf32, #tpu.memory_space<vmem>>, %arg5: memref<1x8x128xf32, #tpu.memory_space<vmem>>, %arg6: memref<1x8x128xf32, #tpu.memory_space<vmem>>) attributes {dimension_semantics = [#tpu.dimension_semantics<parallel>, #tpu.dimension_semantics<arbitrary>], iteration_bounds = array<i64: 1, 1>, scalar_prefetch = 0 : i64, scratch_operands = 0 : i64, tpu.core_type = #tpu.core_type<tc>, window_params = [{pipeline_mode = #tpu.pipeline_mode<synchronous>, transform_indices = @transform_0, window_bounds = array<i64: 16, 32>}, {transform_indices = @transform_1, window_bounds = array<i64: 32, 2048>}, {transform_indices = @transform_2, window_bounds = array<i64: 1, 8, 128>}, {transform_indices = @transform_3, window_bounds = array<i64: 1, 8, 128>}, {transform_indices = @transform_4, window_bounds = array<i64: 1, 8, 128>}]} {
    %c0_i32 = arith.constant 0 : i32
    %0 = arith.cmpi eq, %arg1, %c0_i32 : i32
    %1 = arith.extui %0 : i1 to i32
    %c0_i32_0 = arith.constant 0 : i32
    %2 = arith.cmpi ne, %1, %c0_i32_0 : i32
    scf.if %2 {
      %cst_27 = arith.constant 0.000000e+00 : f32
      %132 = vector.broadcast %cst_27 : f32 to vector<8x128xf32>
      %c0_28 = arith.constant 0 : index
      %c0_29 = arith.constant 0 : index
      %c0_30 = arith.constant 0 : index
      %133 = vector.load %arg4[%c0_28, %c0_29, %c0_30] : memref<1x8x128xf32, #tpu.memory_space<vmem>>, vector<1x8x128xf32>
      %134 = vector.shape_cast %133 : vector<1x8x128xf32> to vector<8x128xf32>
      %135 = vector.shape_cast %132 : vector<8x128xf32> to vector<1x8x128xf32>
      tpu.vector_store %arg4[%c0_28, %c0_29, %c0_30], %135 {strides = array<i32>} : memref<1x8x128xf32, #tpu.memory_space<vmem>>, vector<1x8x128xf32>,
      %cst_31 = arith.constant 0.000000e+00 : f32
      %136 = vector.broadcast %cst_31 : f32 to vector<8x128xf32>
      %c0_32 = arith.constant 0 : index
      %c0_33 = arith.constant 0 : index
      %c0_34 = arith.constant 0 : index
      %137 = vector.load %arg5[%c0_32, %c0_33, %c0_34] : memref<1x8x128xf32, #tpu.memory_space<vmem>>, vector<1x8x128xf32>
      %138 = vector.shape_cast %137 : vector<1x8x128xf32> to vector<8x128xf32>
      %139 = vector.shape_cast %136 : vector<8x128xf32> to vector<1x8x128xf32>
      tpu.vector_store %arg5[%c0_32, %c0_33, %c0_34], %139 {strides = array<i32>} : memref<1x8x128xf32, #tpu.memory_space<vmem>>, vector<1x8x128xf32>,
      %cst_35 = arith.constant 0.000000e+00 : f32
      %140 = vector.broadcast %cst_35 : f32 to vector<8x128xf32>
      %c0_36 = arith.constant 0 : index
      %c0_37 = arith.constant 0 : index
      %c0_38 = arith.constant 0 : index
      %141 = vector.load %arg6[%c0_36, %c0_37, %c0_38] : memref<1x8x128xf32, #tpu.memory_space<vmem>>, vector<1x8x128xf32>
      %142 = vector.shape_cast %141 : vector<1x8x128xf32> to vector<8x128xf32>
      %143 = vector.shape_cast %140 : vector<8x128xf32> to vector<1x8x128xf32>
      tpu.vector_store %arg6[%c0_36, %c0_37, %c0_38], %143 {strides = array<i32>} : memref<1x8x128xf32, #tpu.memory_space<vmem>>, vector<1x8x128xf32>,
    } else {
    }
    %c0 = arith.constant 0 : index
    %c0_1 = arith.constant 0 : index
    %3 = vector.load %arg2[%c0, %c0_1] : memref<16x32xf32, #tpu.memory_space<vmem>>, vector<16x32xf32>
    %c0_2 = arith.constant 0 : index
    %c0_3 = arith.constant 0 : index
    %4 = vector.load %arg3[%c0_2, %c0_3] : memref<32x2048xf32, #tpu.memory_space<vmem>>, vector<32x2048xf32>
    %cst = arith.constant dense<0.000000e+00> : vector<16x2048xf32>
    %5 = tpu.matmul %3, %4, %cst {dimension_numbers = #tpu.dot_dimension_numbers<[1], [0], [0], [1], [0, 0, 1, 1], [], []>} : vector<16x32xf32>, vector<32x2048xf32>, vector<16x2048xf32> -> vector<16x2048xf32>
    %6 = vector.extract_strided_slice %5 {offsets = [0, 0], sizes = [8, 2048], strides = [1, 1]} : vector<16x2048xf32> to vector<8x2048xf32>
    %7 = vector.extract_strided_slice %5 {offsets = [8, 0], sizes = [8, 2048], strides = [1, 1]} : vector<16x2048xf32> to vector<8x2048xf32>
    %cst_4 = arith.constant 1.000000e+00 : f32
    %8 = vector.broadcast %cst_4 : f32 to vector<8x2048xf32>
    %9 = arith.subf %6, %8 : vector<8x2048xf32>
    %cst_5 = arith.constant 1.000000e+04 : f32
    %10 = vector.broadcast %cst_5 : f32 to vector<8x2048xf32>
    %11 = arith.mulf %9, %10 : vector<8x2048xf32>
    %12 = math.exp %11 : vector<8x2048xf32>
    %cst_6 = arith.constant 1.000000e+00 : f32
    %13 = vector.broadcast %cst_6 : f32 to vector<8x2048xf32>
    %14 = arith.subf %7, %13 : vector<8x2048xf32>
    %cst_7 = arith.constant 14.2857141 : f32
    %15 = vector.broadcast %cst_7 : f32 to vector<8x2048xf32>
    %16 = arith.mulf %14, %15 : vector<8x2048xf32>
    %17 = math.exp %16 : vector<8x2048xf32>
    %c0_8 = arith.constant 0 : index
    %c0_9 = arith.constant 0 : index
    %c0_10 = arith.constant 0 : index
    %18 = vector.load %arg4[%c0_8, %c0_9, %c0_10] : memref<1x8x128xf32, #tpu.memory_space<vmem>>, vector<1x8x128xf32>
    %19 = vector.shape_cast %18 : vector<1x8x128xf32> to vector<8x128xf32>
    %20 = vector.extract_strided_slice %12 {offsets = [0, 0], sizes = [8, 128], strides = [1, 1]} : vector<8x2048xf32> to vector<8x128xf32>
    %21 = vector.extract_strided_slice %12 {offsets = [0, 128], sizes = [8, 128], strides = [1, 1]} : vector<8x2048xf32> to vector<8x128xf32>
    %22 = arith.addf %20, %21 : vector<8x128xf32>
    %23 = vector.extract_strided_slice %12 {offsets = [0, 256], sizes = [8, 128], strides = [1, 1]} : vector<8x2048xf32> to vector<8x128xf32>
    %24 = arith.addf %22, %23 : vector<8x128xf32>
    %25 = vector.extract_strided_slice %12 {offsets = [0, 384], sizes = [8, 128], strides = [1, 1]} : vector<8x2048xf32> to vector<8x128xf32>
    %26 = arith.addf %24, %25 : vector<8x128xf32>
    %27 = vector.extract_strided_slice %12 {offsets = [0, 512], sizes = [8, 128], strides = [1, 1]} : vector<8x2048xf32> to vector<8x128xf32>
    %28 = arith.addf %26, %27 : vector<8x128xf32>
    %29 = vector.extract_strided_slice %12 {offsets = [0, 640], sizes = [8, 128], strides = [1, 1]} : vector<8x2048xf32> to vector<8x128xf32>
    %30 = arith.addf %28, %29 : vector<8x128xf32>
    %31 = vector.extract_strided_slice %12 {offsets = [0, 768], sizes = [8, 128], strides = [1, 1]} : vector<8x2048xf32> to vector<8x128xf32>
    %32 = arith.addf %30, %31 : vector<8x128xf32>
    %33 = vector.extract_strided_slice %12 {offsets = [0, 896], sizes = [8, 128], strides = [1, 1]} : vector<8x2048xf32> to vector<8x128xf32>
    %34 = arith.addf %32, %33 : vector<8x128xf32>
    %35 = vector.extract_strided_slice %12 {offsets = [0, 1024], sizes = [8, 128], strides = [1, 1]} : vector<8x2048xf32> to vector<8x128xf32>
    %36 = arith.addf %34, %35 : vector<8x128xf32>
    %37 = vector.extract_strided_slice %12 {offsets = [0, 1152], sizes = [8, 128], strides = [1, 1]} : vector<8x2048xf32> to vector<8x128xf32>
    %38 = arith.addf %36, %37 : vector<8x128xf32>
    %39 = vector.extract_strided_slice %12 {offsets = [0, 1280], sizes = [8, 128], strides = [1, 1]} : vector<8x2048xf32> to vector<8x128xf32>
    %40 = arith.addf %38, %39 : vector<8x128xf32>
    %41 = vector.extract_strided_slice %12 {offsets = [0, 1408], sizes = [8, 128], strides = [1, 1]} : vector<8x2048xf32> to vector<8x128xf32>
    %42 = arith.addf %40, %41 : vector<8x128xf32>
    %43 = vector.extract_strided_slice %12 {offsets = [0, 1536], sizes = [8, 128], strides = [1, 1]} : vector<8x2048xf32> to vector<8x128xf32>
    %44 = arith.addf %42, %43 : vector<8x128xf32>
    %45 = vector.extract_strided_slice %12 {offsets = [0, 1664], sizes = [8, 128], strides = [1, 1]} : vector<8x2048xf32> to vector<8x128xf32>
    %46 = arith.addf %44, %45 : vector<8x128xf32>
    %47 = vector.extract_strided_slice %12 {offsets = [0, 1792], sizes = [8, 128], strides = [1, 1]} : vector<8x2048xf32> to vector<8x128xf32>
    %48 = arith.addf %46, %47 : vector<8x128xf32>
    %49 = vector.extract_strided_slice %12 {offsets = [0, 1920], sizes = [8, 128], strides = [1, 1]} : vector<8x2048xf32> to vector<8x128xf32>
    %50 = arith.addf %48, %49 : vector<8x128xf32>
    %51 = arith.addf %19, %50 : vector<8x128xf32>
    %c0_11 = arith.constant 0 : index
    %c0_12 = arith.constant 0 : index
    %c0_13 = arith.constant 0 : index
    %52 = vector.load %arg4[%c0_11, %c0_12, %c0_13] : memref<1x8x128xf32, #tpu.memory_space<vmem>>, vector<1x8x128xf32>
    %53 = vector.shape_cast %52 : vector<1x8x128xf32> to vector<8x128xf32>
    %54 = vector.shape_cast %51 : vector<8x128xf32> to vector<1x8x128xf32>
    tpu.vector_store %arg4[%c0_11, %c0_12, %c0_13], %54 {strides = array<i32>} : memref<1x8x128xf32, #tpu.memory_space<vmem>>, vector<1x8x128xf32>,
    %c0_14 = arith.constant 0 : index
    %c0_15 = arith.constant 0 : index
    %c0_16 = arith.constant 0 : index
    %55 = vector.load %arg5[%c0_14, %c0_15, %c0_16] : memref<1x8x128xf32, #tpu.memory_space<vmem>>, vector<1x8x128xf32>
    %56 = vector.shape_cast %55 : vector<1x8x128xf32> to vector<8x128xf32>
    %cst_17 = arith.constant 14.2857141 : f32
    %57 = vector.broadcast %cst_17 : f32 to vector<8x2048xf32>
    %58 = arith.mulf %7, %57 : vector<8x2048xf32>
    %59 = arith.mulf %12, %58 : vector<8x2048xf32>
    %60 = vector.extract_strided_slice %59 {offsets = [0, 0], sizes = [8, 128], strides = [1, 1]} : vector<8x2048xf32> to vector<8x128xf32>
    %61 = vector.extract_strided_slice %59 {offsets = [0, 128], sizes = [8, 128], strides = [1, 1]} : vector<8x2048xf32> to vector<8x128xf32>
    %62 = arith.addf %60, %61 : vector<8x128xf32>
    %63 = vector.extract_strided_slice %59 {offsets = [0, 256], sizes = [8, 128], strides = [1, 1]} : vector<8x2048xf32> to vector<8x128xf32>
    %64 = arith.addf %62, %63 : vector<8x128xf32>
    %65 = vector.extract_strided_slice %59 {offsets = [0, 384], sizes = [8, 128], strides = [1, 1]} : vector<8x2048xf32> to vector<8x128xf32>
    %66 = arith.addf %64, %65 : vector<8x128xf32>
    %67 = vector.extract_strided_slice %59 {offsets = [0, 512], sizes = [8, 128], strides = [1, 1]} : vector<8x2048xf32> to vector<8x128xf32>
    %68 = arith.addf %66, %67 : vector<8x128xf32>
    %69 = vector.extract_strided_slice %59 {offsets = [0, 640], sizes = [8, 128], strides = [1, 1]} : vector<8x2048xf32> to vector<8x128xf32>
    %70 = arith.addf %68, %69 : vector<8x128xf32>
    %71 = vector.extract_strided_slice %59 {offsets = [0, 768], sizes = [8, 128], strides = [1, 1]} : vector<8x2048xf32> to vector<8x128xf32>
    %72 = arith.addf %70, %71 : vector<8x128xf32>
    %73 = vector.extract_strided_slice %59 {offsets = [0, 896], sizes = [8, 128], strides = [1, 1]} : vector<8x2048xf32> to vector<8x128xf32>
    %74 = arith.addf %72, %73 : vector<8x128xf32>
    %75 = vector.extract_strided_slice %59 {offsets = [0, 1024], sizes = [8, 128], strides = [1, 1]} : vector<8x2048xf32> to vector<8x128xf32>
    %76 = arith.addf %74, %75 : vector<8x128xf32>
    %77 = vector.extract_strided_slice %59 {offsets = [0, 1152], sizes = [8, 128], strides = [1, 1]} : vector<8x2048xf32> to vector<8x128xf32>
    %78 = arith.addf %76, %77 : vector<8x128xf32>
    %79 = vector.extract_strided_slice %59 {offsets = [0, 1280], sizes = [8, 128], strides = [1, 1]} : vector<8x2048xf32> to vector<8x128xf32>
    %80 = arith.addf %78, %79 : vector<8x128xf32>
    %81 = vector.extract_strided_slice %59 {offsets = [0, 1408], sizes = [8, 128], strides = [1, 1]} : vector<8x2048xf32> to vector<8x128xf32>
    %82 = arith.addf %80, %81 : vector<8x128xf32>
    %83 = vector.extract_strided_slice %59 {offsets = [0, 1536], sizes = [8, 128], strides = [1, 1]} : vector<8x2048xf32> to vector<8x128xf32>
    %84 = arith.addf %82, %83 : vector<8x128xf32>
    %85 = vector.extract_strided_slice %59 {offsets = [0, 1664], sizes = [8, 128], strides = [1, 1]} : vector<8x2048xf32> to vector<8x128xf32>
    %86 = arith.addf %84, %85 : vector<8x128xf32>
    %87 = vector.extract_strided_slice %59 {offsets = [0, 1792], sizes = [8, 128], strides = [1, 1]} : vector<8x2048xf32> to vector<8x128xf32>
    %88 = arith.addf %86, %87 : vector<8x128xf32>
    %89 = vector.extract_strided_slice %59 {offsets = [0, 1920], sizes = [8, 128], strides = [1, 1]} : vector<8x2048xf32> to vector<8x128xf32>
    %90 = arith.addf %88, %89 : vector<8x128xf32>
    %91 = arith.addf %56, %90 : vector<8x128xf32>
    %c0_18 = arith.constant 0 : index
    %c0_19 = arith.constant 0 : index
    %c0_20 = arith.constant 0 : index
    %92 = vector.load %arg5[%c0_18, %c0_19, %c0_20] : memref<1x8x128xf32, #tpu.memory_space<vmem>>, vector<1x8x128xf32>
    %93 = vector.shape_cast %92 : vector<1x8x128xf32> to vector<8x128xf32>
    %94 = vector.shape_cast %91 : vector<8x128xf32> to vector<1x8x128xf32>
    tpu.vector_store %arg5[%c0_18, %c0_19, %c0_20], %94 {strides = array<i32>} : memref<1x8x128xf32, #tpu.memory_space<vmem>>, vector<1x8x128xf32>,
    %c0_21 = arith.constant 0 : index
    %c0_22 = arith.constant 0 : index
    %c0_23 = arith.constant 0 : index
    %95 = vector.load %arg6[%c0_21, %c0_22, %c0_23] : memref<1x8x128xf32, #tpu.memory_space<vmem>>, vector<1x8x128xf32>
    %96 = vector.shape_cast %95 : vector<1x8x128xf32> to vector<8x128xf32>
    %97 = vector.extract_strided_slice %17 {offsets = [0, 0], sizes = [8, 128], strides = [1, 1]} : vector<8x2048xf32> to vector<8x128xf32>
    %98 = vector.extract_strided_slice %17 {offsets = [0, 128], sizes = [8, 128], strides = [1, 1]} : vector<8x2048xf32> to vector<8x128xf32>
    %99 = arith.addf %97, %98 : vector<8x128xf32>
    %100 = vector.extract_strided_slice %17 {offsets = [0, 256], sizes = [8, 128], strides = [1, 1]} : vector<8x2048xf32> to vector<8x128xf32>
    %101 = arith.addf %99, %100 : vector<8x128xf32>
    %102 = vector.extract_strided_slice %17 {offsets = [0, 384], sizes = [8, 128], strides = [1, 1]} : vector<8x2048xf32> to vector<8x128xf32>
    %103 = arith.addf %101, %102 : vector<8x128xf32>
    %104 = vector.extract_strided_slice %17 {offsets = [0, 512], sizes = [8, 128], strides = [1, 1]} : vector<8x2048xf32> to vector<8x128xf32>
    %105 = arith.addf %103, %104 : vector<8x128xf32>
    %106 = vector.extract_strided_slice %17 {offsets = [0, 640], sizes = [8, 128], strides = [1, 1]} : vector<8x2048xf32> to vector<8x128xf32>
    %107 = arith.addf %105, %106 : vector<8x128xf32>
    %108 = vector.extract_strided_slice %17 {offsets = [0, 768], sizes = [8, 128], strides = [1, 1]} : vector<8x2048xf32> to vector<8x128xf32>
    %109 = arith.addf %107, %108 : vector<8x128xf32>
    %110 = vector.extract_strided_slice %17 {offsets = [0, 896], sizes = [8, 128], strides = [1, 1]} : vector<8x2048xf32> to vector<8x128xf32>
    %111 = arith.addf %109, %110 : vector<8x128xf32>
    %112 = vector.extract_strided_slice %17 {offsets = [0, 1024], sizes = [8, 128], strides = [1, 1]} : vector<8x2048xf32> to vector<8x128xf32>
    %113 = arith.addf %111, %112 : vector<8x128xf32>
    %114 = vector.extract_strided_slice %17 {offsets = [0, 1152], sizes = [8, 128], strides = [1, 1]} : vector<8x2048xf32> to vector<8x128xf32>
    %115 = arith.addf %113, %114 : vector<8x128xf32>
    %116 = vector.extract_strided_slice %17 {offsets = [0, 1280], sizes = [8, 128], strides = [1, 1]} : vector<8x2048xf32> to vector<8x128xf32>
    %117 = arith.addf %115, %116 : vector<8x128xf32>
    %118 = vector.extract_strided_slice %17 {offsets = [0, 1408], sizes = [8, 128], strides = [1, 1]} : vector<8x2048xf32> to vector<8x128xf32>
    %119 = arith.addf %117, %118 : vector<8x128xf32>
    %120 = vector.extract_strided_slice %17 {offsets = [0, 1536], sizes = [8, 128], strides = [1, 1]} : vector<8x2048xf32> to vector<8x128xf32>
    %121 = arith.addf %119, %120 : vector<8x128xf32>
    %122 = vector.extract_strided_slice %17 {offsets = [0, 1664], sizes = [8, 128], strides = [1, 1]} : vector<8x2048xf32> to vector<8x128xf32>
    %123 = arith.addf %121, %122 : vector<8x128xf32>
    %124 = vector.extract_strided_slice %17 {offsets = [0, 1792], sizes = [8, 128], strides = [1, 1]} : vector<8x2048xf32> to vector<8x128xf32>
    %125 = arith.addf %123, %124 : vector<8x128xf32>
    %126 = vector.extract_strided_slice %17 {offsets = [0, 1920], sizes = [8, 128], strides = [1, 1]} : vector<8x2048xf32> to vector<8x128xf32>
    %127 = arith.addf %125, %126 : vector<8x128xf32>
    %128 = arith.addf %96, %127 : vector<8x128xf32>
    %c0_24 = arith.constant 0 : index
    %c0_25 = arith.constant 0 : index
    %c0_26 = arith.constant 0 : index
    %129 = vector.load %arg6[%c0_24, %c0_25, %c0_26] : memref<1x8x128xf32, #tpu.memory_space<vmem>>, vector<1x8x128xf32>
    %130 = vector.shape_cast %129 : vector<1x8x128xf32> to vector<8x128xf32>
    %131 = vector.shape_cast %128 : vector<8x128xf32> to vector<1x8x128xf32>
    tpu.vector_store %arg6[%c0_24, %c0_25, %c0_26], %131 {strides = array<i32>} : memref<1x8x128xf32, #tpu.memory_space<vmem>>, vector<1x8x128xf32>,
    return
  }
  func.func @transform_0(%arg0: i32, %arg1: i32) -> (i32, i32) {
    %c0_i32 = arith.constant 0 : i32
    %c0_i32_0 = arith.constant 0 : i32
    %c0_i32_1 = arith.constant 0 : i32
    return %c0_i32, %c0_i32_0 : i32, i32
  }
  func.func @transform_1(%arg0: i32, %arg1: i32) -> (i32, i32) {
    %c1_i32 = arith.constant 1 : i32
    %0 = arith.muli %arg0, %c1_i32 : i32
    %1 = arith.addi %0, %arg1 : i32
    %c0_i32 = arith.constant 0 : i32
    %c0_i32_0 = arith.constant 0 : i32
    return %c0_i32, %1 : i32, i32
  }
  func.func @transform_2(%arg0: i32, %arg1: i32) -> (i32, i32, i32) {
    %c0_i32 = arith.constant 0 : i32
    %c0_i32_0 = arith.constant 0 : i32
    %c0_i32_1 = arith.constant 0 : i32
    return %arg0, %c0_i32, %c0_i32_0 : i32, i32, i32
  }
  func.func @transform_3(%arg0: i32, %arg1: i32) -> (i32, i32, i32) {
    %c0_i32 = arith.constant 0 : i32
    %c0_i32_0 = arith.constant 0 : i32
    %c0_i32_1 = arith.constant 0 : i32
    return %arg0, %c0_i32, %c0_i32_0 : i32, i32, i32
  }
  func.func @transform_4(%arg0: i32, %arg1: i32) -> (i32, i32, i32) {
    %c0_i32 = arith.constant 0 : i32
    %c0_i32_0 = arith.constant 0 : i32
    %c0_i32_1 = arith.constant 0 : i32
    return %arg0, %c0_i32, %c0_i32_0 : i32, i32, i32
  }
}

</mosaic_0001>

<llo_original>
// kernel: tpu_custom_call.1
$region0: #{tpu_custom_call.1}
  #allocation0 [shape = 'u32[]', space=smem, size = 0x4, offset = 0x4, fixed_abs, tag = 'smem constant byte address 0x4 - core index']
  #allocation1 [shape = 'u32[144,128]{1,0:T(1,128)}', space=vmem, size = 0x12000, scoped, tag = 'internal scratch']
  %s0 = inlined_call_operand.hbm [shape: f32[16,32], index: 0, kind: input, shape index: {}]
  %s1 = inlined_call_operand.hbm [shape: f32[32,2048], index: 1, kind: input, shape index: {}]
  %s2 = inlined_call_operand.hbm [shape: f32[1,8,128], index: 2, kind: output, shape index: {0}]
  %s3 = inlined_call_operand.hbm [shape: f32[1,8,128], index: 3, kind: output, shape index: {1}]
  %s4 = inlined_call_operand.hbm [shape: f32[1,8,128], index: 4, kind: output, shape index: {2}]
  %5 = xla_tuple %s2, %s3, %s4
  %s6 = sld [smem:[#allocation0]]
  $region46: #{tpu_custom_call.1} parent=0
    _
  %s8 = ssub.s32 1, %s6
  %s9 = scalar_select 0, %s8, %s6
  $region1: #{tpu_custom_call.1} parent=0
    #allocation2 [shape = 'u8[8192]{0}', space=vmem, size = 0x2000, scoped, tag = 'input window, operand 0, single buffered']
    #allocation3 [shape = 's32[1]{0}', space=sflag, size = 0x4, scoped, tag = 'scoped memory for tpu_custom_call.1']
    #allocation4 [shape = 's32[1]{0}', space=sflag, size = 0x4, scoped, tag = 'scoped memory for tpu_custom_call.1']
    #allocation5 [shape = 'u8[262144]{0}', space=vmem, size = 0x40000, scoped, tag = 'input window, operand 1, single buffered']
    #allocation6 [shape = 's32[1]{0}', space=sflag, size = 0x4, scoped, tag = 'scoped memory for tpu_custom_call.1']
    #allocation7 [shape = 'u8[4096]{0}', space=vmem, size = 0x1000, scoped, tag = 'output window, operand 0, single buffered']
    #allocation8 [shape = 'u8[4096]{0}', space=vmem, size = 0x1000, scoped, tag = 'output window, operand 1, single buffered']
    #allocation9 [shape = 's32[1]{0}', space=sflag, size = 0x4, scoped, tag = 'scoped memory for tpu_custom_call.1']
    #allocation10 [shape = 'u8[4096]{0}', space=vmem, size = 0x1000, scoped, tag = 'output window, operand 2, single buffered']
    %10 = vsyncpa [#allocation3], 0
    %11 = vsyncpa [#allocation6], 0
    %12 = vsyncpa [#allocation4], 0
    %13 = vsyncpa [#allocation9], 0
    // Predicated region
    $region2: #{tpu_custom_call.1} parent=1 // pred_check
      _
    $region3: #{tpu_custom_call.1} parent=1 // pred_check_branch
      %15 = sbr.rel (0) target = $region5
    $region4: #{tpu_custom_call.1} parent=1 // pred_region
      %s17 = ssub.s32 256, 256
      %18 = vsyncadd [#allocation3], %s17
      %s19 = sshll.u32 [#allocation2], 4
      %s20 = int_to_ptr.vmem [resolvable:$true] %s19
      %25 = dma.hbm_to_vmem [thread:$0]  %s0, 256, %s20, [#allocation3], 128, 128, 8
    $region5: #{tpu_custom_call.1} parent=1 // pred_fallthru
      _
    // Predicated region
    $region6: #{tpu_custom_call.1} parent=1 // pred_check
      _
    $region7: #{tpu_custom_call.1} parent=1 // pred_check_branch
      %27 = sbr.rel (0) target = $region9
    $region8: #{tpu_custom_call.1} parent=1 // pred_region
      %s28 = sadd.s32 0, 0
      %s29 = smul.u32 16, %s28
      %s31 = ssub.s32 8192, 8192
      %32 = vsyncadd [#allocation6], %s31
      %s33 = smul.addr %s29, 128
      %s34 = scalar_lea.hbm %s1, %s33
      %s35 = sshll.u32 [#allocation5], 4
      %s36 = int_to_ptr.vmem [resolvable:$true] %s35
      %41 = dma.hbm_to_vmem [thread:$0]  %s34, 8192, %s36, [#allocation6], 2048, 2048, 128
    $region9: #{tpu_custom_call.1} parent=1 // pred_fallthru
      _
    // Predicated region
    $region10: #{tpu_custom_call.1} parent=1 // pred_check
      _
    $region11: #{tpu_custom_call.1} parent=1 // pred_check_branch
      %43 = sbr.rel (0) target = $region13
    $region12: #{tpu_custom_call.1} parent=1 // pred_region
      %44 = dma.done [#allocation3], 256
    $region13: #{tpu_custom_call.1} parent=1 // pred_fallthru
      _
    // Predicated region
    $region14: #{tpu_custom_call.1} parent=1 // pred_check
      _
    $region15: #{tpu_custom_call.1} parent=1 // pred_check_branch
      %46 = sbr.rel (0) target = $region17
    $region16: #{tpu_custom_call.1} parent=1 // pred_region
      %47 = dma.done [#allocation6], 8192
    $region17: #{tpu_custom_call.1} parent=1 // pred_fallthru
      _
    %s48 = sadd.s32 0, 0
    %s49 = smul.u32 16, %s48
    %p50 = scmp.eq.s32.totalorder 0, 0
    // Predicated region
    $region18: #{tpu_custom_call.1} parent=1 // pred_check
      %p51 = pneg %p50
    $region19: #{tpu_custom_call.1} parent=1 // pred_check_branch
      %53 = sbr.rel (%p51) target = $region21
    $region20: #{tpu_custom_call.1} parent=1 // pred_region
      %54 = vst [vmem:[#allocation7] sm:$0xff] 0.0
      %55 = vst [vmem:[#allocation8] sm:$0xff] 0.0
      %56 = vst [vmem:[#allocation10] sm:$0xff] 0.0
    $region21: #{tpu_custom_call.1} parent=1 // pred_fallthru
      _
    %v57 = vld [vmem:[#allocation2] sm:$0xff]
    %v58 = vld [vmem:[#allocation2 + $0x8] sm:$0xff]
    %v59 = vld [vmem:[#allocation5] sm:$0xff]
    %v60 = vld [vmem:[#allocation5 + $0x8] sm:$0xff]
    %v61 = vld [vmem:[#allocation5 + $0x10] sm:$0xff]
    %v62 = vld [vmem:[#allocation5 + $0x18] sm:$0xff]
    %v63 = vld [vmem:[#allocation5 + $0x20] sm:$0xff]
    %v64 = vld [vmem:[#allocation5 + $0x28] sm:$0xff]
    %v65 = vld [vmem:[#allocation5 + $0x30] sm:$0xff]
    %v66 = vld [vmem:[#allocation5 + $0x38] sm:$0xff]
    %v67 = vld [vmem:[#allocation5 + $0x40] sm:$0xff]
    %v68 = vld [vmem:[#allocation5 + $0x48] sm:$0xff]
    %v69 = vld [vmem:[#allocation5 + $0x50] sm:$0xff]
    %v70 = vld [vmem:[#allocation5 + $0x58] sm:$0xff]
    %v71 = vld [vmem:[#allocation5 + $0x60] sm:$0xff]
    %v72 = vld [vmem:[#allocation5 + $0x68] sm:$0xff]
    %v73 = vld [vmem:[#allocation5 + $0x70] sm:$0xff]
    %v74 = vld [vmem:[#allocation5 + $0x78] sm:$0xff]
    %v75 = vld [vmem:[#allocation5 + $0x80] sm:$0xff]
    %v76 = vld [vmem:[#allocation5 + $0x88] sm:$0xff]
    %v77 = vld [vmem:[#allocation5 + $0x90] sm:$0xff]
    %v78 = vld [vmem:[#allocation5 + $0x98] sm:$0xff]
    %v79 = vld [vmem:[#allocation5 + $0xa0] sm:$0xff]
    %v80 = vld [vmem:[#allocation5 + $0xa8] sm:$0xff]
    %v81 = vld [vmem:[#allocation5 + $0xb0] sm:$0xff]
    %v82 = vld [vmem:[#allocation5 + $0xb8] sm:$0xff]
    %v83 = vld [vmem:[#allocation5 + $0xc0] sm:$0xff]
    %v84 = vld [vmem:[#allocation5 + $0xc8] sm:$0xff]
    %v85 = vld [vmem:[#allocation5 + $0xd0] sm:$0xff]
    %v86 = vld [vmem:[#allocation5 + $0xd8] sm:$0xff]
    %v87 = vld [vmem:[#allocation5 + $0xe0] sm:$0xff]
    %v88 = vld [vmem:[#allocation5 + $0xe8] sm:$0xff]
    %v89 = vld [vmem:[#allocation5 + $0xf0] sm:$0xff]
    %v90 = vld [vmem:[#allocation5 + $0xf8] sm:$0xff]
    %v91 = vld [vmem:[#allocation5 + $0x100] sm:$0xff]
    %v92 = vld [vmem:[#allocation5 + $0x108] sm:$0xff]
    %v93 = vld [vmem:[#allocation5 + $0x110] sm:$0xff]
    %v94 = vld [vmem:[#allocation5 + $0x118] sm:$0xff]
    %v95 = vld [vmem:[#allocation5 + $0x120] sm:$0xff]
    %v96 = vld [vmem:[#allocation5 + $0x128] sm:$0xff]
    %v97 = vld [vmem:[#allocation5 + $0x130] sm:$0xff]
    %v98 = vld [vmem:[#allocation5 + $0x138] sm:$0xff]
    %v99 = vld [vmem:[#allocation5 + $0x140] sm:$0xff]
    %v100 = vld [vmem:[#allocation5 + $0x148] sm:$0xff]
    %v101 = vld [vmem:[#allocation5 + $0x150] sm:$0xff]
    %v102 = vld [vmem:[#allocation5 + $0x158] sm:$0xff]
    %v103 = vld [vmem:[#allocation5 + $0x160] sm:$0xff]
    %v104 = vld [vmem:[#allocation5 + $0x168] sm:$0xff]
    %v105 = vld [vmem:[#allocation5 + $0x170] sm:$0xff]
    %v106 = vld [vmem:[#allocation5 + $0x178] sm:$0xff]
    %v107 = vld [vmem:[#allocation5 + $0x180] sm:$0xff]
    %v108 = vld [vmem:[#allocation5 + $0x188] sm:$0xff]
    %v109 = vld [vmem:[#allocation5 + $0x190] sm:$0xff]
    %v110 = vld [vmem:[#allocation5 + $0x198] sm:$0xff]
    %v111 = vld [vmem:[#allocation5 + $0x1a0] sm:$0xff]
    %v112 = vld [vmem:[#allocation5 + $0x1a8] sm:$0xff]
    %v113 = vld [vmem:[#allocation5 + $0x1b0] sm:$0xff]
    %v114 = vld [vmem:[#allocation5 + $0x1b8] sm:$0xff]
    %v115 = vld [vmem:[#allocation5 + $0x1c0] sm:$0xff]
    %v116 = vld [vmem:[#allocation5 + $0x1c8] sm:$0xff]
    %v117 = vld [vmem:[#allocation5 + $0x1d0] sm:$0xff]
    %v118 = vld [vmem:[#allocation5 + $0x1d8] sm:$0xff]
    %v119 = vld [vmem:[#allocation5 + $0x1e0] sm:$0xff]
    %v120 = vld [vmem:[#allocation5 + $0x1e8] sm:$0xff]
    %v121 = vld [vmem:[#allocation5 + $0x1f0] sm:$0xff]
    %v122 = vld [vmem:[#allocation5 + $0x1f8] sm:$0xff]
    %vm123 = vcmask 261120
    %v125 = vsel %vm123, %v57, 0
    %v128 = vsel %vm123, %v58, 0
    %130 = vmatprep.subr.mxu0 %v60
    %131 = vmatpush1.msra.mxu0 %v59
    %132 = vmatprep.subr.mxu0 %v76
    %133 = vmatpush1.msra.mxu0 %v75
    %134 = vmatprep.subr.mxu0 %v92
    %135 = vmatpush1.msra.mxu0 %v91
    %136 = vmatprep.subr.mxu0 %v108
    %137 = vmatpush1.msra.mxu0 %v107
    %138 = vmatprep.subr.mxu0 0.0
    %139 = vmatpush1.msra.mxu0 0.0
    %140 = vmatprep.subr.mxu0 0.0
    %141 = vmatpush1.msra.mxu0 0.0
    %142 = vmatprep.subr.mxu0 0.0
    %143 = vmatpush1.msra.mxu0 0.0
    %144 = vmatprep.subr.mxu0 0.0
    %145 = vmatpush1.msra.mxu0 0.0
    %146 = vmatprep.subr.mxu0 0.0
    %147 = vmatpush1.msra.mxu0 0.0
    %148 = vmatprep.subr.mxu0 0.0
    %149 = vmatpush1.msra.mxu0 0.0
    %150 = vmatprep.subr.mxu0 0.0
    %151 = vmatpush1.msra.mxu0 0.0
    %152 = vmatprep.subr.mxu0 0.0
    %153 = vmatpush1.msra.mxu0 0.0
    %154 = vmatprep.subr.mxu0 0.0
    %155 = vmatpush1.msra.mxu0 0.0
    %156 = vmatprep.subr.mxu0 0.0
    %157 = vmatpush1.msra.mxu0 0.0
    %158 = vmatprep.subr.mxu0 0.0
    %159 = vmatpush1.msra.mxu0 0.0
    %160 = vmatprep.subr.mxu0 0.0
    %161 = vmatpush1.msra.mxu0 0.0
    %162 = vmatprep.subr.mxu0 0.0
    %163 = vmatpush1.msra.mxu0 0.0
    %164 = vmatprep.subr.mxu0 0.0
    %165 = vmatpush1.msra.mxu0 0.0
    %166 = vmatprep.subr.mxu0 0.0
    %167 = vmatpush1.msra.mxu0 0.0
    %168 = vmatprep.subr.mxu0 0.0
    %169 = vmatpush1.msra.mxu0 0.0
    %170 = vmatprep.subr.mxu0 0.0
    %171 = vmatpush1.msra.mxu0 0.0
    %172 = vmatprep.subr.mxu0 0.0
    %173 = vmatpush1.msra.mxu0 0.0
    %174 = vmatprep.subr.mxu0 0.0
    %175 = vmatpush1.msra.mxu0 0.0
    %176 = vmatprep.subr.mxu0 0.0
    %177 = vmatpush1.msra.mxu0 0.0
    %178 = vmatprep.subr.mxu0 0.0
    %179 = vmatpush1.msra.mxu0 0.0
    %180 = vmatprep.subr.mxu0 0.0
    %181 = vmatpush1.msra.mxu0 0.0
    %182 = vmatprep.subr.mxu0 0.0
    %183 = vmatpush1.msra.mxu0 0.0
    %184 = vmatprep.subr.mxu0 0.0
    %185 = vmatpush1.msra.mxu0 0.0
    %186 = vmatprep.subr.mxu0 0.0
    %187 = vmatpush1.msra.mxu0 0.0
    %188 = vmatprep.subr.mxu0 0.0
    %189 = vmatpush1.msra.mxu0 0.0
    %190 = vmatprep.subr.mxu0 0.0
    %191 = vmatpush1.msra.mxu0 0.0
    %192 = vmatprep.subr.mxu0 0.0
    %193 = vmatpush1.msra.mxu0 0.0
    %194 = vmatprep.mubr.f32.mxu0 0.0
    %195 = vmatmul.mubr.f32.gmra.mrb[0].mxu0 %v125
    %v196 = vpop.f32.mrb[0].mxu0
    %v197 = vadd.f32 0.0, %v196
    %v198 = vpop.f32.mrb[0].mxu0
    %v199 = vadd.f32 0.0, %v198
    %200 = vmatprep.mubr.f32.mxu0 0.0
    %201 = vmatmul.mubr.f32.gmra.mrb[0].mxu0 %v128
    %v202 = vpop.f32.mrb[0].mxu0
    %v203 = vadd.f32 0.0, %v202
    %v204 = vpop.f32.mrb[0].mxu0
    %v205 = vadd.f32 0.0, %v204
    %206 = vdwg.mxu0
    %207 = vmatprep.subr.mxu0 %v62
    %208 = vmatpush1.msra.mxu0 %v61
    %209 = vmatprep.subr.mxu0 %v78
    %210 = vmatpush1.msra.mxu0 %v77
    %211 = vmatprep.subr.mxu0 %v94
    %212 = vmatpush1.msra.mxu0 %v93
    %213 = vmatprep.subr.mxu0 %v110
    %214 = vmatpush1.msra.mxu0 %v109
    %215 = vmatprep.subr.mxu0 0.0
    %216 = vmatpush1.msra.mxu0 0.0
    %217 = vmatprep.subr.mxu0 0.0
    %218 = vmatpush1.msra.mxu0 0.0
    %219 = vmatprep.subr.mxu0 0.0
    %220 = vmatpush1.msra.mxu0 0.0
    %221 = vmatprep.subr.mxu0 0.0
    %222 = vmatpush1.msra.mxu0 0.0
    %223 = vmatprep.subr.mxu0 0.0
    %224 = vmatpush1.msra.mxu0 0.0
    %225 = vmatprep.subr.mxu0 0.0
    %226 = vmatpush1.msra.mxu0 0.0
    %227 = vmatprep.subr.mxu0 0.0
    %228 = vmatpush1.msra.mxu0 0.0
    %229 = vmatprep.subr.mxu0 0.0
    %230 = vmatpush1.msra.mxu0 0.0
    %231 = vmatprep.subr.mxu0 0.0
    %232 = vmatpush1.msra.mxu0 0.0
    %233 = vmatprep.subr.mxu0 0.0
    %234 = vmatpush1.msra.mxu0 0.0
    %235 = vmatprep.subr.mxu0 0.0
    %236 = vmatpush1.msra.mxu0 0.0
    %237 = vmatprep.subr.mxu0 0.0
    %238 = vmatpush1.msra.mxu0 0.0
    %239 = vmatprep.subr.mxu0 0.0
    %240 = vmatpush1.msra.mxu0 0.0
    %241 = vmatprep.subr.mxu0 0.0
    %242 = vmatpush1.msra.mxu0 0.0
    %243 = vmatprep.subr.mxu0 0.0
    %244 = vmatpush1.msra.mxu0 0.0
    %245 = vmatprep.subr.mxu0 0.0
    %246 = vmatpush1.msra.mxu0 0.0
    %247 = vmatprep.subr.mxu0 0.0
    %248 = vmatpush1.msra.mxu0 0.0
    %249 = vmatprep.subr.mxu0 0.0
    %250 = vmatpush1.msra.mxu0 0.0
    %251 = vmatprep.subr.mxu0 0.0
    %252 = vmatpush1.msra.mxu0 0.0
    %253 = vmatprep.subr.mxu0 0.0
    %254 = vmatpush1.msra.mxu0 0.0
    %255 = vmatprep.subr.mxu0 0.0
    %256 = vmatpush1.msra.mxu0 0.0
    %257 = vmatprep.subr.mxu0 0.0
    %258 = vmatpush1.msra.mxu0 0.0
    %259 = vmatprep.subr.mxu0 0.0
    %260 = vmatpush1.msra.mxu0 0.0
    %261 = vmatprep.subr.mxu0 0.0
    %262 = vmatpush1.msra.mxu0 0.0
    %263 = vmatprep.subr.mxu0 0.0
    %264 = vmatpush1.msra.mxu0 0.0
    %265 = vmatprep.subr.mxu0 0.0
    %266 = vmatpush1.msra.mxu0 0.0
    %267 = vmatprep.subr.mxu0 0.0
    %268 = vmatpush1.msra.mxu0 0.0
    %269 = vmatprep.subr.mxu0 0.0
    %270 = vmatpush1.msra.mxu0 0.0
    %271 = vmatprep.mubr.f32.mxu0 0.0
    %272 = vmatmul.mubr.f32.gmra.mrb[0].mxu0 %v125
    %v273 = vpop.f32.mrb[0].mxu0
    %v274 = vadd.f32 0.0, %v273
    %v275 = vpop.f32.mrb[0].mxu0
    %v276 = vadd.f32 0.0, %v275
    %277 = vmatprep.mubr.f32.mxu0 0.0
    %278 = vmatmul.mubr.f32.gmra.mrb[0].mxu0 %v128
    %v279 = vpop.f32.mrb[0].mxu0
    %v280 = vadd.f32 0.0, %v279
    %v281 = vpop.f32.mrb[0].mxu0
    %v282 = vadd.f32 0.0, %v281
    %283 = vdwg.mxu0
    %284 = vmatprep.subr.mxu0 %v64
    %285 = vmatpush1.msra.mxu0 %v63
    %286 = vmatprep.subr.mxu0 %v80
    %287 = vmatpush1.msra.mxu0 %v79
    %288 = vmatprep.subr.mxu0 %v96
    %289 = vmatpush1.msra.mxu0 %v95
    %290 = vmatprep.subr.mxu0 %v112
    %291 = vmatpush1.msra.mxu0 %v111
    %292 = vmatprep.subr.mxu0 0.0
    %293 = vmatpush1.msra.mxu0 0.0
    %294 = vmatprep.subr.mxu0 0.0
    %295 = vmatpush1.msra.mxu0 0.0
    %296 = vmatprep.subr.mxu0 0.0
    %297 = vmatpush1.msra.mxu0 0.0
    %298 = vmatprep.subr.mxu0 0.0
    %299 = vmatpush1.msra.mxu0 0.0
    %300 = vmatprep.subr.mxu0 0.0
    %301 = vmatpush1.msra.mxu0 0.0
    %302 = vmatprep.subr.mxu0 0.0
    %303 = vmatpush1.msra.mxu0 0.0
    %304 = vmatprep.subr.mxu0 0.0
    %305 = vmatpush1.msra.mxu0 0.0
    %306 = vmatprep.subr.mxu0 0.0
    %307 = vmatpush1.msra.mxu0 0.0
    %308 = vmatprep.subr.mxu0 0.0
    %309 = vmatpush1.msra.mxu0 0.0
    %310 = vmatprep.subr.mxu0 0.0
    %311 = vmatpush1.msra.mxu0 0.0
    %312 = vmatprep.subr.mxu0 0.0
    %313 = vmatpush1.msra.mxu0 0.0
    %314 = vmatprep.subr.mxu0 0.0
    %315 = vmatpush1.msra.mxu0 0.0
    %316 = vmatprep.subr.mxu0 0.0
    %317 = vmatpush1.msra.mxu0 0.0
    %318 = vmatprep.subr.mxu0 0.0
    %319 = vmatpush1.msra.mxu0 0.0
    %320 = vmatprep.subr.mxu0 0.0
    %321 = vmatpush1.msra.mxu0 0.0
    %322 = vmatprep.subr.mxu0 0.0
    %323 = vmatpush1.msra.mxu0 0.0
    %324 = vmatprep.subr.mxu0 0.0
    %325 = vmatpush1.msra.mxu0 0.0
    %326 = vmatprep.subr.mxu0 0.0
    %327 = vmatpush1.msra.mxu0 0.0
    %328 = vmatprep.subr.mxu0 0.0
    %329 = vmatpush1.msra.mxu0 0.0
    %330 = vmatprep.subr.mxu0 0.0
    %331 = vmatpush1.msra.mxu0 0.0
    %332 = vmatprep.subr.mxu0 0.0
    %333 = vmatpush1.msra.mxu0 0.0
    %334 = vmatprep.subr.mxu0 0.0
    %335 = vmatpush1.msra.mxu0 0.0
    %336 = vmatprep.subr.mxu0 0.0
    %337 = vmatpush1.msra.mxu0 0.0
    %338 = vmatprep.subr.mxu0 0.0
    %339 = vmatpush1.msra.mxu0 0.0
    %340 = vmatprep.subr.mxu0 0.0
    %341 = vmatpush1.msra.mxu0 0.0
    %342 = vmatprep.subr.mxu0 0.0
    %343 = vmatpush1.msra.mxu0 0.0
    %344 = vmatprep.subr.mxu0 0.0
    %345 = vmatpush1.msra.mxu0 0.0
    %346 = vmatprep.subr.mxu0 0.0
    %347 = vmatpush1.msra.mxu0 0.0
    %348 = vmatprep.mubr.f32.mxu0 0.0
    %349 = vmatmul.mubr.f32.gmra.mrb[0].mxu0 %v125
    %v350 = vpop.f32.mrb[0].mxu0
    %v351 = vadd.f32 0.0, %v350
    %v352 = vpop.f32.mrb[0].mxu0
    %v353 = vadd.f32 0.0, %v352
    %354 = vmatprep.mubr.f32.mxu0 0.0
    %355 = vmatmul.mubr.f32.gmra.mrb[0].mxu0 %v128
    %v356 = vpop.f32.mrb[0].mxu0
    %v357 = vadd.f32 0.0, %v356
    %v358 = vpop.f32.mrb[0].mxu0
    %v359 = vadd.f32 0.0, %v358
    %360 = vdwg.mxu0
    %361 = vmatprep.subr.mxu0 %v66
    %362 = vmatpush1.msra.mxu0 %v65
    %363 = vmatprep.subr.mxu0 %v82
    %364 = vmatpush1.msra.mxu0 %v81
    %365 = vmatprep.subr.mxu0 %v98
    %366 = vmatpush1.msra.mxu0 %v97
    %367 = vmatprep.subr.mxu0 %v114
    %368 = vmatpush1.msra.mxu0 %v113
    %369 = vmatprep.subr.mxu0 0.0
    %370 = vmatpush1.msra.mxu0 0.0
    %371 = vmatprep.subr.mxu0 0.0
    %372 = vmatpush1.msra.mxu0 0.0
    %373 = vmatprep.subr.mxu0 0.0
    %374 = vmatpush1.msra.mxu0 0.0
    %375 = vmatprep.subr.mxu0 0.0
    %376 = vmatpush1.msra.mxu0 0.0
    %377 = vmatprep.subr.mxu0 0.0
    %378 = vmatpush1.msra.mxu0 0.0
    %379 = vmatprep.subr.mxu0 0.0
    %380 = vmatpush1.msra.mxu0 0.0
    %381 = vmatprep.subr.mxu0 0.0
    %382 = vmatpush1.msra.mxu0 0.0
    %383 = vmatprep.subr.mxu0 0.0
    %384 = vmatpush1.msra.mxu0 0.0
    %385 = vmatprep.subr.mxu0 0.0
    %386 = vmatpush1.msra.mxu0 0.0
    %387 = vmatprep.subr.mxu0 0.0
    %388 = vmatpush1.msra.mxu0 0.0
    %389 = vmatprep.subr.mxu0 0.0
    %390 = vmatpush1.msra.mxu0 0.0
    %391 = vmatprep.subr.mxu0 0.0
    %392 = vmatpush1.msra.mxu0 0.0
    %393 = vmatprep.subr.mxu0 0.0
    %394 = vmatpush1.msra.mxu0 0.0
    %395 = vmatprep.subr.mxu0 0.0
    %396 = vmatpush1.msra.mxu0 0.0
    %397 = vmatprep.subr.mxu0 0.0
    %398 = vmatpush1.msra.mxu0 0.0
    %399 = vmatprep.subr.mxu0 0.0
    %400 = vmatpush1.msra.mxu0 0.0
    %401 = vmatprep.subr.mxu0 0.0
    %402 = vmatpush1.msra.mxu0 0.0
    %403 = vmatprep.subr.mxu0 0.0
    %404 = vmatpush1.msra.mxu0 0.0
    %405 = vmatprep.subr.mxu0 0.0
    %406 = vmatpush1.msra.mxu0 0.0
    %407 = vmatprep.subr.mxu0 0.0
    %408 = vmatpush1.msra.mxu0 0.0
    %409 = vmatprep.subr.mxu0 0.0
    %410 = vmatpush1.msra.mxu0 0.0
    %411 = vmatprep.subr.mxu0 0.0
    %412 = vmatpush1.msra.mxu0 0.0
    %413 = vmatprep.subr.mxu0 0.0
    %414 = vmatpush1.msra.mxu0 0.0
    %415 = vmatprep.subr.mxu0 0.0
    %416 = vmatpush1.msra.mxu0 0.0
    %417 = vmatprep.subr.mxu0 0.0
    %418 = vmatpush1.msra.mxu0 0.0
    %419 = vmatprep.subr.mxu0 0.0
    %420 = vmatpush1.msra.mxu0 0.0
    %421 = vmatprep.subr.mxu0 0.0
    %422 = vmatpush1.msra.mxu0 0.0
    %423 = vmatprep.subr.mxu0 0.0
    %424 = vmatpush1.msra.mxu0 0.0
    %425 = vmatprep.mubr.f32.mxu0 0.0
    %426 = vmatmul.mubr.f32.gmra.mrb[0].mxu0 %v125
    %v427 = vpop.f32.mrb[0].mxu0
    %v428 = vadd.f32 0.0, %v427
    %v429 = vpop.f32.mrb[0].mxu0
    %v430 = vadd.f32 0.0, %v429
    %431 = vmatprep.mubr.f32.mxu0 0.0
    %432 = vmatmul.mubr.f32.gmra.mrb[0].mxu0 %v128
    %v433 = vpop.f32.mrb[0].mxu0
    %v434 = vadd.f32 0.0, %v433
    %v435 = vpop.f32.mrb[0].mxu0
    %v436 = vadd.f32 0.0, %v435
    %437 = vdwg.mxu0
    %438 = vmatprep.subr.mxu0 %v68
    %439 = vmatpush1.msra.mxu0 %v67
    %440 = vmatprep.subr.mxu0 %v84
    %441 = vmatpush1.msra.mxu0 %v83
    %442 = vmatprep.subr.mxu0 %v100
    %443 = vmatpush1.msra.mxu0 %v99
    %444 = vmatprep.subr.mxu0 %v116
    %445 = vmatpush1.msra.mxu0 %v115
    %446 = vmatprep.subr.mxu0 0.0
    %447 = vmatpush1.msra.mxu0 0.0
    %448 = vmatprep.subr.mxu0 0.0
    %449 = vmatpush1.msra.mxu0 0.0
    %450 = vmatprep.subr.mxu0 0.0
    %451 = vmatpush1.msra.mxu0 0.0
    %452 = vmatprep.subr.mxu0 0.0
    %453 = vmatpush1.msra.mxu0 0.0
    %454 = vmatprep.subr.mxu0 0.0
    %455 = vmatpush1.msra.mxu0 0.0
    %456 = vmatprep.subr.mxu0 0.0
    %457 = vmatpush1.msra.mxu0 0.0
    %458 = vmatprep.subr.mxu0 0.0
    %459 = vmatpush1.msra.mxu0 0.0
    %460 = vmatprep.subr.mxu0 0.0
    %461 = vmatpush1.msra.mxu0 0.0
    %462 = vmatprep.subr.mxu0 0.0
    %463 = vmatpush1.msra.mxu0 0.0
    %464 = vmatprep.subr.mxu0 0.0
    %465 = vmatpush1.msra.mxu0 0.0
    %466 = vmatprep.subr.mxu0 0.0
    %467 = vmatpush1.msra.mxu0 0.0
    %468 = vmatprep.subr.mxu0 0.0
    %469 = vmatpush1.msra.mxu0 0.0
    %470 = vmatprep.subr.mxu0 0.0
    %471 = vmatpush1.msra.mxu0 0.0
    %472 = vmatprep.subr.mxu0 0.0
    %473 = vmatpush1.msra.mxu0 0.0
    %474 = vmatprep.subr.mxu0 0.0
    %475 = vmatpush1.msra.mxu0 0.0
    %476 = vmatprep.subr.mxu0 0.0
    %477 = vmatpush1.msra.mxu0 0.0
    %478 = vmatprep.subr.mxu0 0.0
    %479 = vmatpush1.msra.mxu0 0.0
    %480 = vmatprep.subr.mxu0 0.0
    %481 = vmatpush1.msra.mxu0 0.0
    %482 = vmatprep.subr.mxu0 0.0
    %483 = vmatpush1.msra.mxu0 0.0
    %484 = vmatprep.subr.mxu0 0.0
    %485 = vmatpush1.msra.mxu0 0.0
    %486 = vmatprep.subr.mxu0 0.0
    %487 = vmatpush1.msra.mxu0 0.0
    %488 = vmatprep.subr.mxu0 0.0
    %489 = vmatpush1.msra.mxu0 0.0
    %490 = vmatprep.subr.mxu0 0.0
    %491 = vmatpush1.msra.mxu0 0.0
    %492 = vmatprep.subr.mxu0 0.0
    %493 = vmatpush1.msra.mxu0 0.0
    %494 = vmatprep.subr.mxu0 0.0
    %495 = vmatpush1.msra.mxu0 0.0
    %496 = vmatprep.subr.mxu0 0.0
    %497 = vmatpush1.msra.mxu0 0.0
    %498 = vmatprep.subr.mxu0 0.0
    %499 = vmatpush1.msra.mxu0 0.0
    %500 = vmatprep.subr.mxu0 0.0
    %501 = vmatpush1.msra.mxu0 0.0
    %502 = vmatprep.mubr.f32.mxu0 0.0
    %503 = vmatmul.mubr.f32.gmra.mrb[0].mxu0 %v125
    %v504 = vpop.f32.mrb[0].mxu0
    %v505 = vadd.f32 0.0, %v504
    %v506 = vpop.f32.mrb[0].mxu0
    %v507 = vadd.f32 0.0, %v506
    %508 = vmatprep.mubr.f32.mxu0 0.0
    %509 = vmatmul.mubr.f32.gmra.mrb[0].mxu0 %v128
    %v510 = vpop.f32.mrb[0].mxu0
    %v511 = vadd.f32 0.0, %v510
    %v512 = vpop.f32.mrb[0].mxu0
    %v513 = vadd.f32 0.0, %v512
    %514 = vdwg.mxu0
    %515 = vmatprep.subr.mxu0 %v70
    %516 = vmatpush1.msra.mxu0 %v69
    %517 = vmatprep.subr.mxu0 %v86
    %518 = vmatpush1.msra.mxu0 %v85
    %519 = vmatprep.subr.mxu0 %v102
    %520 = vmatpush1.msra.mxu0 %v101
    %521 = vmatprep.subr.mxu0 %v118
    %522 = vmatpush1.msra.mxu0 %v117
    %523 = vmatprep.subr.mxu0 0.0
    %524 = vmatpush1.msra.mxu0 0.0
    %525 = vmatprep.subr.mxu0 0.0
    %526 = vmatpush1.msra.mxu0 0.0
    %527 = vmatprep.subr.mxu0 0.0
    %528 = vmatpush1.msra.mxu0 0.0
    %529 = vmatprep.subr.mxu0 0.0
    %530 = vmatpush1.msra.mxu0 0.0
    %531 = vmatprep.subr.mxu0 0.0
    %532 = vmatpush1.msra.mxu0 0.0
    %533 = vmatprep.subr.mxu0 0.0
    %534 = vmatpush1.msra.mxu0 0.0
    %535 = vmatprep.subr.mxu0 0.0
    %536 = vmatpush1.msra.mxu0 0.0
    %537 = vmatprep.subr.mxu0 0.0
    %538 = vmatpush1.msra.mxu0 0.0
    %539 = vmatprep.subr.mxu0 0.0
    %540 = vmatpush1.msra.mxu0 0.0
    %541 = vmatprep.subr.mxu0 0.0
    %542 = vmatpush1.msra.mxu0 0.0
    %543 = vmatprep.subr.mxu0 0.0
    %544 = vmatpush1.msra.mxu0 0.0
    %545 = vmatprep.subr.mxu0 0.0
    %546 = vmatpush1.msra.mxu0 0.0
    %547 = vmatprep.subr.mxu0 0.0
    %548 = vmatpush1.msra.mxu0 0.0
    %549 = vmatprep.subr.mxu0 0.0
    %550 = vmatpush1.msra.mxu0 0.0
    %551 = vmatprep.subr.mxu0 0.0
    %552 = vmatpush1.msra.mxu0 0.0
    %553 = vmatprep.subr.mxu0 0.0
    %554 = vmatpush1.msra.mxu0 0.0
    %555 = vmatprep.subr.mxu0 0.0
    %556 = vmatpush1.msra.mxu0 0.0
    %557 = vmatprep.subr.mxu0 0.0
    %558 = vmatpush1.msra.mxu0 0.0
    %559 = vmatprep.subr.mxu0 0.0
    %560 = vmatpush1.msra.mxu0 0.0
    %561 = vmatprep.subr.mxu0 0.0
    %562 = vmatpush1.msra.mxu0 0.0
    %563 = vmatprep.subr.mxu0 0.0
    %564 = vmatpush1.msra.mxu0 0.0
    %565 = vmatprep.subr.mxu0 0.0
    %566 = vmatpush1.msra.mxu0 0.0
    %567 = vmatprep.subr.mxu0 0.0
    %568 = vmatpush1.msra.mxu0 0.0
    %569 = vmatprep.subr.mxu0 0.0
    %570 = vmatpush1.msra.mxu0 0.0
    %571 = vmatprep.subr.mxu0 0.0
    %572 = vmatpush1.msra.mxu0 0.0
    %573 = vmatprep.subr.mxu0 0.0
    %574 = vmatpush1.msra.mxu0 0.0
    %575 = vmatprep.subr.mxu0 0.0
    %576 = vmatpush1.msra.mxu0 0.0
    %577 = vmatprep.subr.mxu0 0.0
    %578 = vmatpush1.msra.mxu0 0.0
    %579 = vmatprep.mubr.f32.mxu0 0.0
    %580 = vmatmul.mubr.f32.gmra.mrb[0].mxu0 %v125
    %v581 = vpop.f32.mrb[0].mxu0
    %v582 = vadd.f32 0.0, %v581
    %v583 = vpop.f32.mrb[0].mxu0
    %v584 = vadd.f32 0.0, %v583
    %585 = vmatprep.mubr.f32.mxu0 0.0
    %586 = vmatmul.mubr.f32.gmra.mrb[0].mxu0 %v128
    %v587 = vpop.f32.mrb[0].mxu0
    %v588 = vadd.f32 0.0, %v587
    %v589 = vpop.f32.mrb[0].mxu0
    %v590 = vadd.f32 0.0, %v589
    %591 = vdwg.mxu0
    %592 = vmatprep.subr.mxu0 %v72
    %593 = vmatpush1.msra.mxu0 %v71
    %594 = vmatprep.subr.mxu0 %v88
    %595 = vmatpush1.msra.mxu0 %v87
    %596 = vmatprep.subr.mxu0 %v104
    %597 = vmatpush1.msra.mxu0 %v103
    %598 = vmatprep.subr.mxu0 %v120
    %599 = vmatpush1.msra.mxu0 %v119
    %600 = vmatprep.subr.mxu0 0.0
    %601 = vmatpush1.msra.mxu0 0.0
    %602 = vmatprep.subr.mxu0 0.0
    %603 = vmatpush1.msra.mxu0 0.0
    %604 = vmatprep.subr.mxu0 0.0
    %605 = vmatpush1.msra.mxu0 0.0
    %606 = vmatprep.subr.mxu0 0.0
    %607 = vmatpush1.msra.mxu0 0.0
    %608 = vmatprep.subr.mxu0 0.0
    %609 = vmatpush1.msra.mxu0 0.0
    %610 = vmatprep.subr.mxu0 0.0
    %611 = vmatpush1.msra.mxu0 0.0
    %612 = vmatprep.subr.mxu0 0.0
    %613 = vmatpush1.msra.mxu0 0.0
    %614 = vmatprep.subr.mxu0 0.0
    %615 = vmatpush1.msra.mxu0 0.0
    %616 = vmatprep.subr.mxu0 0.0
    %617 = vmatpush1.msra.mxu0 0.0
    %618 = vmatprep.subr.mxu0 0.0
    %619 = vmatpush1.msra.mxu0 0.0
    %620 = vmatprep.subr.mxu0 0.0
    %621 = vmatpush1.msra.mxu0 0.0
    %622 = vmatprep.subr.mxu0 0.0
    %623 = vmatpush1.msra.mxu0 0.0
    %624 = vmatprep.subr.mxu0 0.0
    %625 = vmatpush1.msra.mxu0 0.0
    %626 = vmatprep.subr.mxu0 0.0
    %627 = vmatpush1.msra.mxu0 0.0
    %628 = vmatprep.subr.mxu0 0.0
    %629 = vmatpush1.msra.mxu0 0.0
    %630 = vmatprep.subr.mxu0 0.0
    %631 = vmatpush1.msra.mxu0 0.0
    %632 = vmatprep.subr.mxu0 0.0
    %633 = vmatpush1.msra.mxu0 0.0
    %634 = vmatprep.subr.mxu0 0.0
    %635 = vmatpush1.msra.mxu0 0.0
    %636 = vmatprep.subr.mxu0 0.0
    %637 = vmatpush1.msra.mxu0 0.0
    %638 = vmatprep.subr.mxu0 0.0
    %639 = vmatpush1.msra.mxu0 0.0
    %640 = vmatprep.subr.mxu0 0.0
    %641 = vmatpush1.msra.mxu0 0.0
    %642 = vmatprep.subr.mxu0 0.0
    %643 = vmatpush1.msra.mxu0 0.0
    %644 = vmatprep.subr.mxu0 0.0
    %645 = vmatpush1.msra.mxu0 0.0
    %646 = vmatprep.subr.mxu0 0.0
    %647 = vmatpush1.msra.mxu0 0.0
    %648 = vmatprep.subr.mxu0 0.0
    %649 = vmatpush1.msra.mxu0 0.0
    %650 = vmatprep.subr.mxu0 0.0
    %651 = vmatpush1.msra.mxu0 0.0
    %652 = vmatprep.subr.mxu0 0.0
    %653 = vmatpush1.msra.mxu0 0.0
    %654 = vmatprep.subr.mxu0 0.0
    %655 = vmatpush1.msra.mxu0 0.0
    %656 = vmatprep.mubr.f32.mxu0 0.0
    %657 = vmatmul.mubr.f32.gmra.mrb[0].mxu0 %v125
    %v658 = vpop.f32.mrb[0].mxu0
    %v659 = vadd.f32 0.0, %v658
    %v660 = vpop.f32.mrb[0].mxu0
    %v661 = vadd.f32 0.0, %v660
    %662 = vmatprep.mubr.f32.mxu0 0.0
    %663 = vmatmul.mubr.f32.gmra.mrb[0].mxu0 %v128
    %v664 = vpop.f32.mrb[0].mxu0
    %v665 = vadd.f32 0.0, %v664
    %v666 = vpop.f32.mrb[0].mxu0
    %v667 = vadd.f32 0.0, %v666
    %668 = vdwg.mxu0
    %669 = vmatprep.subr.mxu0 %v74
    %670 = vmatpush1.msra.mxu0 %v73
    %671 = vmatprep.subr.mxu0 %v90
    %672 = vmatpush1.msra.mxu0 %v89
    %673 = vmatprep.subr.mxu0 %v106
    %674 = vmatpush1.msra.mxu0 %v105
    %675 = vmatprep.subr.mxu0 %v122
    %676 = vmatpush1.msra.mxu0 %v121
    %677 = vmatprep.subr.mxu0 0.0
    %678 = vmatpush1.msra.mxu0 0.0
    %679 = vmatprep.subr.mxu0 0.0
    %680 = vmatpush1.msra.mxu0 0.0
    %681 = vmatprep.subr.mxu0 0.0
    %682 = vmatpush1.msra.mxu0 0.0
    %683 = vmatprep.subr.mxu0 0.0
    %684 = vmatpush1.msra.mxu0 0.0
    %685 = vmatprep.subr.mxu0 0.0
    %686 = vmatpush1.msra.mxu0 0.0
    %687 = vmatprep.subr.mxu0 0.0
    %688 = vmatpush1.msra.mxu0 0.0
    %689 = vmatprep.subr.mxu0 0.0
    %690 = vmatpush1.msra.mxu0 0.0
    %691 = vmatprep.subr.mxu0 0.0
    %692 = vmatpush1.msra.mxu0 0.0
    %693 = vmatprep.subr.mxu0 0.0
    %694 = vmatpush1.msra.mxu0 0.0
    %695 = vmatprep.subr.mxu0 0.0
    %696 = vmatpush1.msra.mxu0 0.0
    %697 = vmatprep.subr.mxu0 0.0
    %698 = vmatpush1.msra.mxu0 0.0
    %699 = vmatprep.subr.mxu0 0.0
    %700 = vmatpush1.msra.mxu0 0.0
    %701 = vmatprep.subr.mxu0 0.0
    %702 = vmatpush1.msra.mxu0 0.0
    %703 = vmatprep.subr.mxu0 0.0
    %704 = vmatpush1.msra.mxu0 0.0
    %705 = vmatprep.subr.mxu0 0.0
    %706 = vmatpush1.msra.mxu0 0.0
    %707 = vmatprep.subr.mxu0 0.0
    %708 = vmatpush1.msra.mxu0 0.0
    %709 = vmatprep.subr.mxu0 0.0
    %710 = vmatpush1.msra.mxu0 0.0
    %711 = vmatprep.subr.mxu0 0.0
    %712 = vmatpush1.msra.mxu0 0.0
    %713 = vmatprep.subr.mxu0 0.0
    %714 = vmatpush1.msra.mxu0 0.0
    %715 = vmatprep.subr.mxu0 0.0
    %716 = vmatpush1.msra.mxu0 0.0
    %717 = vmatprep.subr.mxu0 0.0
    %718 = vmatpush1.msra.mxu0 0.0
    %719 = vmatprep.subr.mxu0 0.0
    %720 = vmatpush1.msra.mxu0 0.0
    %721 = vmatprep.subr.mxu0 0.0
    %722 = vmatpush1.msra.mxu0 0.0
    %723 = vmatprep.subr.mxu0 0.0
    %724 = vmatpush1.msra.mxu0 0.0
    %725 = vmatprep.subr.mxu0 0.0
    %726 = vmatpush1.msra.mxu0 0.0
    %727 = vmatprep.subr.mxu0 0.0
    %728 = vmatpush1.msra.mxu0 0.0
    %729 = vmatprep.subr.mxu0 0.0
    %730 = vmatpush1.msra.mxu0 0.0
    %731 = vmatprep.subr.mxu0 0.0
    %732 = vmatpush1.msra.mxu0 0.0
    %733 = vmatprep.mubr.f32.mxu0 0.0
    %734 = vmatmul.mubr.f32.gmra.mrb[0].mxu0 %v125
    %v735 = vpop.f32.mrb[0].mxu0
    %v736 = vadd.f32 0.0, %v735
    %v737 = vpop.f32.mrb[0].mxu0
    %v738 = vadd.f32 0.0, %v737
    %739 = vmatprep.mubr.f32.mxu0 0.0
    %740 = vmatmul.mubr.f32.gmra.mrb[0].mxu0 %v128
    %v741 = vpop.f32.mrb[0].mxu0
    %v742 = vadd.f32 0.0, %v741
    %v743 = vpop.f32.mrb[0].mxu0
    %v744 = vadd.f32 0.0, %v743
    %745 = vdwg.mxu0
    %v746 = vsub.f32 %v197, 1.0
    %v747 = vsub.f32 %v199, 1.0
    %v748 = vsub.f32 %v274, 1.0
    %v749 = vsub.f32 %v276, 1.0
    %v750 = vsub.f32 %v351, 1.0
    %v751 = vsub.f32 %v353, 1.0
    %v752 = vsub.f32 %v428, 1.0
    %v753 = vsub.f32 %v430, 1.0
    %v754 = vsub.f32 %v505, 1.0
    %v755 = vsub.f32 %v507, 1.0
    %v756 = vsub.f32 %v582, 1.0
    %v757 = vsub.f32 %v584, 1.0
    %v758 = vsub.f32 %v659, 1.0
    %v759 = vsub.f32 %v661, 1.0
    %v760 = vsub.f32 %v736, 1.0
    %v761 = vsub.f32 %v738, 1.0
    %v762 = vmul.f32 %v746, 10000.0
    %v763 = vmul.f32 %v747, 10000.0
    %v764 = vmul.f32 %v748, 10000.0
    %v765 = vmul.f32 %v749, 10000.0
    %v766 = vmul.f32 %v750, 10000.0
    %v767 = vmul.f32 %v751, 10000.0
    %v768 = vmul.f32 %v752, 10000.0
    %v769 = vmul.f32 %v753, 10000.0
    %v770 = vmul.f32 %v754, 10000.0
    %v771 = vmul.f32 %v755, 10000.0
    %v772 = vmul.f32 %v756, 10000.0
    %v773 = vmul.f32 %v757, 10000.0
    %v774 = vmul.f32 %v758, 10000.0
    %v775 = vmul.f32 %v759, 10000.0
    %v776 = vmul.f32 %v760, 10000.0
    %v777 = vmul.f32 %v761, 10000.0
    %v778 = vmul.f32 %v762, 1.442695
    %v779 = vpow.pop %v778
    %v780 = vmul.f32 %v763, 1.442695
    %v781 = vpow.pop %v780
    %v782 = vmul.f32 %v764, 1.442695
    %v783 = vpow.pop %v782
    %v784 = vmul.f32 %v765, 1.442695
    %v785 = vpow.pop %v784
    %v786 = vmul.f32 %v766, 1.442695
    %v787 = vpow.pop %v786
    %v788 = vmul.f32 %v767, 1.442695
    %v789 = vpow.pop %v788
    %v790 = vmul.f32 %v768, 1.442695
    %v791 = vpow.pop %v790
    %v792 = vmul.f32 %v769, 1.442695
    %v793 = vpow.pop %v792
    %v794 = vmul.f32 %v770, 1.442695
    %v795 = vpow.pop %v794
    %v796 = vmul.f32 %v771, 1.442695
    %v797 = vpow.pop %v796
    %v798 = vmul.f32 %v772, 1.442695
    %v799 = vpow.pop %v798
    %v800 = vmul.f32 %v773, 1.442695
    %v801 = vpow.pop %v800
    %v802 = vmul.f32 %v774, 1.442695
    %v803 = vpow.pop %v802
    %v804 = vmul.f32 %v775, 1.442695
    %v805 = vpow.pop %v804
    %v806 = vmul.f32 %v776, 1.442695
    %v807 = vpow.pop %v806
    %v808 = vmul.f32 %v777, 1.442695
    %v809 = vpow.pop %v808
    %v810 = vsub.f32 %v203, 1.0
    %v811 = vsub.f32 %v205, 1.0
    %v812 = vsub.f32 %v280, 1.0
    %v813 = vsub.f32 %v282, 1.0
    %v814 = vsub.f32 %v357, 1.0
    %v815 = vsub.f32 %v359, 1.0
    %v816 = vsub.f32 %v434, 1.0
    %v817 = vsub.f32 %v436, 1.0
    %v818 = vsub.f32 %v511, 1.0
    %v819 = vsub.f32 %v513, 1.0
    %v820 = vsub.f32 %v588, 1.0
    %v821 = vsub.f32 %v590, 1.0
    %v822 = vsub.f32 %v665, 1.0
    %v823 = vsub.f32 %v667, 1.0
    %v824 = vsub.f32 %v742, 1.0
    %v825 = vsub.f32 %v744, 1.0
    %v826 = vmul.f32 %v810, 14.285714
    %v827 = vmul.f32 %v811, 14.285714
    %v828 = vmul.f32 %v812, 14.285714
    %v829 = vmul.f32 %v813, 14.285714
    %v830 = vmul.f32 %v814, 14.285714
    %v831 = vmul.f32 %v815, 14.285714
    %v832 = vmul.f32 %v816, 14.285714
    %v833 = vmul.f32 %v817, 14.285714
    %v834 = vmul.f32 %v818, 14.285714
    %v835 = vmul.f32 %v819, 14.285714
    %v836 = vmul.f32 %v820, 14.285714
    %v837 = vmul.f32 %v821, 14.285714
    %v838 = vmul.f32 %v822, 14.285714
    %v839 = vmul.f32 %v823, 14.285714
    %v840 = vmul.f32 %v824, 14.285714
    %v841 = vmul.f32 %v825, 14.285714
    %v842 = vmul.f32 %v826, 1.442695
    %v843 = vpow.pop %v842
    %v844 = vmul.f32 %v827, 1.442695
    %v845 = vpow.pop %v844
    %v846 = vmul.f32 %v828, 1.442695
    %v847 = vpow.pop %v846
    %v848 = vmul.f32 %v829, 1.442695
    %v849 = vpow.pop %v848
    %v850 = vmul.f32 %v830, 1.442695
    %v851 = vpow.pop %v850
    %v852 = vmul.f32 %v831, 1.442695
    %v853 = vpow.pop %v852
    %v854 = vmul.f32 %v832, 1.442695
    %v855 = vpow.pop %v854
    %v856 = vmul.f32 %v833, 1.442695
    %v857 = vpow.pop %v856
    %v858 = vmul.f32 %v834, 1.442695
    %v859 = vpow.pop %v858
    %v860 = vmul.f32 %v835, 1.442695
    %v861 = vpow.pop %v860
    %v862 = vmul.f32 %v836, 1.442695
    %v863 = vpow.pop %v862
    %v864 = vmul.f32 %v837, 1.442695
    %v865 = vpow.pop %v864
    %v866 = vmul.f32 %v838, 1.442695
    %v867 = vpow.pop %v866
    %v868 = vmul.f32 %v839, 1.442695
    %v869 = vpow.pop %v868
    %v870 = vmul.f32 %v840, 1.442695
    %v871 = vpow.pop %v870
    %v872 = vmul.f32 %v841, 1.442695
    %v873 = vpow.pop %v872
    %v874 = vld [vmem:[#allocation7] sm:$0xff]
    %v875 = vadd.f32 %v779, %v781
    %v876 = vadd.f32 %v875, %v783
    %v877 = vadd.f32 %v876, %v785
    %v878 = vadd.f32 %v877, %v787
    %v879 = vadd.f32 %v878, %v789
    %v880 = vadd.f32 %v879, %v791
    %v881 = vadd.f32 %v880, %v793
    %v882 = vadd.f32 %v881, %v795
    %v883 = vadd.f32 %v882, %v797
    %v884 = vadd.f32 %v883, %v799
    %v885 = vadd.f32 %v884, %v801
    %v886 = vadd.f32 %v885, %v803
    %v887 = vadd.f32 %v886, %v805
    %v888 = vadd.f32 %v887, %v807
    %v889 = vadd.f32 %v888, %v809
    %v890 = vadd.f32 %v874, %v889
    %891 = vst [vmem:[#allocation7] sm:$0xff] %v890
    %v892 = vld [vmem:[#allocation8] sm:$0xff]
    %v893 = vmul.f32 %v203, 14.285714
    %v894 = vmul.f32 %v205, 14.285714
    %v895 = vmul.f32 %v280, 14.285714
    %v896 = vmul.f32 %v282, 14.285714
    %v897 = vmul.f32 %v357, 14.285714
    %v898 = vmul.f32 %v359, 14.285714
    %v899 = vmul.f32 %v434, 14.285714
    %v900 = vmul.f32 %v436, 14.285714
    %v901 = vmul.f32 %v511, 14.285714
    %v902 = vmul.f32 %v513, 14.285714
    %v903 = vmul.f32 %v588, 14.285714
    %v904 = vmul.f32 %v590, 14.285714
    %v905 = vmul.f32 %v665, 14.285714
    %v906 = vmul.f32 %v667, 14.285714
    %v907 = vmul.f32 %v742, 14.285714
    %v908 = vmul.f32 %v744, 14.285714
    %v909 = vmul.f32 %v779, %v893
    %v910 = vmul.f32 %v781, %v894
    %v911 = vmul.f32 %v783, %v895
    %v912 = vmul.f32 %v785, %v896
    %v913 = vmul.f32 %v787, %v897
    %v914 = vmul.f32 %v789, %v898
    %v915 = vmul.f32 %v791, %v899
    %v916 = vmul.f32 %v793, %v900
    %v917 = vmul.f32 %v795, %v901
    %v918 = vmul.f32 %v797, %v902
    %v919 = vmul.f32 %v799, %v903
    %v920 = vmul.f32 %v801, %v904
    %v921 = vmul.f32 %v803, %v905
    %v922 = vmul.f32 %v805, %v906
    %v923 = vmul.f32 %v807, %v907
    %v924 = vmul.f32 %v809, %v908
    %v925 = vadd.f32 %v909, %v910
    %v926 = vadd.f32 %v925, %v911
    %v927 = vadd.f32 %v926, %v912
    %v928 = vadd.f32 %v927, %v913
    %v929 = vadd.f32 %v928, %v914
    %v930 = vadd.f32 %v929, %v915
    %v931 = vadd.f32 %v930, %v916
    %v932 = vadd.f32 %v931, %v917
    %v933 = vadd.f32 %v932, %v918
    %v934 = vadd.f32 %v933, %v919
    %v935 = vadd.f32 %v934, %v920
    %v936 = vadd.f32 %v935, %v921
    %v937 = vadd.f32 %v936, %v922
    %v938 = vadd.f32 %v937, %v923
    %v939 = vadd.f32 %v938, %v924
    %v940 = vadd.f32 %v892, %v939
    %941 = vst [vmem:[#allocation8] sm:$0xff] %v940
    %v942 = vld [vmem:[#allocation10] sm:$0xff]
    %v943 = vadd.f32 %v843, %v845
    %v944 = vadd.f32 %v943, %v847
    %v945 = vadd.f32 %v944, %v849
    %v946 = vadd.f32 %v945, %v851
    %v947 = vadd.f32 %v946, %v853
    %v948 = vadd.f32 %v947, %v855
    %v949 = vadd.f32 %v948, %v857
    %v950 = vadd.f32 %v949, %v859
    %v951 = vadd.f32 %v950, %v861
    %v952 = vadd.f32 %v951, %v863
    %v953 = vadd.f32 %v952, %v865
    %v954 = vadd.f32 %v953, %v867
    %v955 = vadd.f32 %v954, %v869
    %v956 = vadd.f32 %v955, %v871
    %v957 = vadd.f32 %v956, %v873
    %v958 = vadd.f32 %v942, %v957
    %959 = vst [vmem:[#allocation10] sm:$0xff] %v958
    // Predicated region
    $region22: #{tpu_custom_call.1} parent=1 // pred_check
      _
    $region23: #{tpu_custom_call.1} parent=1 // pred_check_branch
      %961 = sbr.rel (0) target = $region25
    $region24: #{tpu_custom_call.1} parent=1 // pred_region
      %s963 = ssub.s32 128, 128
      %964 = vsyncadd [#allocation4], %s963
      %s966 = sshll.u32 [#allocation7], 4
      %s967 = int_to_ptr.vmem [resolvable:$true] %s966
      %969 = dma.vmem_to_hbm [thread:$0]  %s967, 128, %s2, [#allocation4]
    $region25: #{tpu_custom_call.1} parent=1 // pred_fallthru
      _
    // Predicated region
    $region26: #{tpu_custom_call.1} parent=1 // pred_check
      _
    $region27: #{tpu_custom_call.1} parent=1 // pred_check_branch
      %971 = sbr.rel (0) target = $region29
    $region28: #{tpu_custom_call.1} parent=1 // pred_region
      %s973 = ssub.s32 128, 128
      %974 = vsyncadd [#allocation9], %s973
      %s976 = sshll.u32 [#allocation8], 4
      %s977 = int_to_ptr.vmem [resolvable:$true] %s976
      %979 = dma.vmem_to_hbm [thread:$0]  %s977, 128, %s3, [#allocation9]
    $region29: #{tpu_custom_call.1} parent=1 // pred_fallthru
      _
    // Predicated region
    $region30: #{tpu_custom_call.1} parent=1 // pred_check
      _
    $region31: #{tpu_custom_call.1} parent=1 // pred_check_branch
      %981 = sbr.rel (0) target = $region33
    $region32: #{tpu_custom_call.1} parent=1 // pred_region
      %s983 = ssub.s32 128, 128
      %984 = vsyncadd [#allocation9], %s983
      %s986 = sshll.u32 [#allocation10], 4
      %s987 = int_to_ptr.vmem [resolvable:$true] %s986
      %989 = dma.vmem_to_hbm [thread:$0]  %s987, 128, %s4, [#allocation9]
    $region33: #{tpu_custom_call.1} parent=1 // pred_fallthru
      _
    // Predicated region
    $region34: #{tpu_custom_call.1} parent=1 // pred_check
      _
    $region35: #{tpu_custom_call.1} parent=1 // pred_check_branch
      %991 = sbr.rel (0) target = $region37
    $region36: #{tpu_custom_call.1} parent=1 // pred_region
      %992 = dma.done [#allocation4], 128
    $region37: #{tpu_custom_call.1} parent=1 // pred_fallthru
      _
    // Predicated region
    $region38: #{tpu_custom_call.1} parent=1 // pred_check
      _
    $region39: #{tpu_custom_call.1} parent=1 // pred_check_branch
      %994 = sbr.rel (0) target = $region41
    $region40: #{tpu_custom_call.1} parent=1 // pred_region
      %995 = dma.done [#allocation9], 128
    $region41: #{tpu_custom_call.1} parent=1 // pred_fallthru
      _
    // Predicated region
    $region42: #{tpu_custom_call.1} parent=1 // pred_check
      _
    $region43: #{tpu_custom_call.1} parent=1 // pred_check_branch
      %997 = sbr.rel (0) target = $region45
    $region44: #{tpu_custom_call.1} parent=1 // pred_region
      %998 = dma.done [#allocation9], 128
    $region45: #{tpu_custom_call.1} parent=1 // pred_fallthru
      _
    %999 = vsyncpa [#allocation3], 1
    %1000 = vsyncpa [#allocation6], 1
    %1001 = vsyncpa [#allocation4], 1
    %1002 = vsyncpa [#allocation9], 1

</llo_original>
